<compile_context>
chip_gen: v5e
topology: v5e:2x2
jax: 0.10.0
libtpu: 0.0.40
codegen_flags: <defaults>
</compile_context>

<pallas_src>
import functools

import jax
import jax.numpy as jnp
from jax.experimental import pallas as pl
from jax.experimental.pallas import tpu as pltpu

_EPS = 1e-5  # nn.BatchNorm2d default eps
_VMEM_LIMIT = 32 * 1024 * 1024  # explicit, safe on v5e/v6e/v7x


def _round_up(x, m):
    return ((x + m - 1) // m) * m


# ---------------------------------------------------------------------------
# Pallas kernels
# ---------------------------------------------------------------------------
def _matmul_stats_kernel(x_ref, w_ref, y_ref, s_ref, acc_ref):
    """Tiled (tm,tk)@(tk,tn) MXU matmul with f32 accumulator; on the last K step
    writes the (bf16) conv tile plus per-channel sum / sum-of-squares partials."""
    @pl.when(pl.program_id(2) == 0)
    def _():
        acc_ref[...] = jnp.zeros_like(acc_ref)

    acc_ref[...] += jnp.dot(x_ref[...], w_ref[...],
                            preferred_element_type=jnp.float32)

    @pl.when(pl.program_id(2) == pl.num_programs(2) - 1)
    def _():
        acc = acc_ref[...]
        y_ref[...] = acc.astype(y_ref.dtype)
        ssum = jnp.sum(acc, axis=0, keepdims=True)        # (1, tn)
        ssq = jnp.sum(acc * acc, axis=0, keepdims=True)   # (1, tn)
        pad = jnp.zeros((6, acc.shape[1]), jnp.float32)
        s_ref[...] = jnp.concatenate([ssum, ssq, pad], axis=0)[None]


def _bn_apply_kernel(*refs, relu: bool, mode: str):
    """out = y*a + b  [+ residual | + y_s*a_s + b_s]  [ReLU], tiled over (M, Cout)."""
    if mode == "bn":
        y_ref, a_ref, b_ref, ys_ref, as_ref, bs_ref, o_ref = refs
    elif mode == "identity":
        y_ref, a_ref, b_ref, r_ref, o_ref = refs
    else:  # "none"
        y_ref, a_ref, b_ref, o_ref = refs
    out = y_ref[...].astype(jnp.float32) * a_ref[...] + b_ref[...]
    if mode == "bn":
        out = out + (ys_ref[...].astype(jnp.float32) * as_ref[...] + bs_ref[...])
    elif mode == "identity":
        out = out + r_ref[...]
    if relu:
        out = jnp.maximum(out, 0.0)
    o_ref[...] = out.astype(o_ref.dtype)


def _maxpool_kernel(t_ref, o_ref):
    """Running max over window taps delivered on the inner grid axis."""
    v = t_ref[0]
    @pl.when(pl.program_id(1) == 0)
    def _():
        o_ref[...] = v
    @pl.when(pl.program_id(1) > 0)
    def _():
        o_ref[...] = jnp.maximum(o_ref[...], v)


# ---------------------------------------------------------------------------
# JAX glue
# ---------------------------------------------------------------------------
def _extract_patches(x, k, stride, pad, pad_value):
    """x: (N, H, W, C) -> (N, Ho, Wo, k*k, C). Pure data movement (glue)."""
    n, h, w, c = x.shape
    xp = jnp.pad(x, ((0, 0), (pad, pad), (pad, pad), (0, 0)),
                 constant_values=pad_value)
    ho = (h + 2 * pad - k) // stride + 1
    wo = (w + 2 * pad - k) // stride + 1
    taps = []
    for kh in range(k):
        for kw in range(k):
            taps.append(xp[:, kh:kh + stride * ho:stride,
                           kw:kw + stride * wo:stride, :])
    return jnp.stack(taps, axis=3)  # (N, Ho, Wo, k*k, C)


def _pad2(x, rows, cols):
    r, c = x.shape
    return jnp.pad(x, ((0, rows - r), (0, cols - c)))


def _conv_stats(x, w, gamma, beta, *, stride, pad,
                base_tm=512, base_tn=256, base_tk=512):
    """Pass 1: im2col matmul (bf16/MXU/f32-acc) + BN batch statistics.

    Returns a dict with the padded bf16 conv output, per-channel BN scale/shift
    (a, b), and the tiling metadata needed by pass 2.
    """
    n, _, _, cin = x.shape
    cout, _, k, _ = w.shape
    patches = _extract_patches(x.astype(jnp.bfloat16), k, stride, pad, 0.0)
    _, ho, wo, kk, _ = patches.shape
    m = n * ho * wo
    kdim = kk * cin

    # Tile sizes (clipped to the padded problem; sublane/lane aligned).
    tm = min(base_tm, _round_up(m, 16))
    tn = min(base_tn, _round_up(cout, 128))
    tk = min(base_tk, _round_up(kdim, 128))
    mp = _round_up(m, tm)
    cp = _round_up(cout, tn)
    kp = _round_up(kdim, tk)
    m_tiles, n_tiles, k_tiles = mp // tm, cp // tn, kp // tk

    xm = _pad2(patches.reshape(m, kdim), mp, kp)
    # PyTorch weight (Cout, Cin, kh, kw) -> (kh*kw*Cin, Cout) matching patch ordering.
    wm = _pad2(jnp.transpose(w, (2, 3, 1, 0)).reshape(kdim, cout).astype(jnp.bfloat16),
               kp, cp)

    y, st = pl.pallas_call(
        _matmul_stats_kernel,
        grid=(m_tiles, n_tiles, k_tiles),
        in_specs=[pl.BlockSpec((tm, tk), lambda mi, ni, ki: (mi, ki)),
                  pl.BlockSpec((tk, tn), lambda mi, ni, ki: (ki, ni))],
        out_specs=[pl.BlockSpec((tm, tn), lambda mi, ni, ki: (mi, ni)),
                   pl.BlockSpec((1, 8, tn), lambda mi, ni, ki: (mi, 0, ni))],
        out_shape=[jax.ShapeDtypeStruct((mp, cp), jnp.bfloat16),
                   jax.ShapeDtypeStruct((m_tiles, 8, cp), jnp.float32)],
        scratch_shapes=[pltpu.VMEM((tm, tn), jnp.float32)],
        compiler_params=pltpu.CompilerParams(
            dimension_semantics=("parallel", "parallel", "arbitrary"),
            vmem_limit_bytes=_VMEM_LIMIT),
    )(xm, wm)

    # Batch statistics (training-mode BN): zero-padded rows contribute 0 to both sums,
    # so dividing by the true M keeps the statistics exact.
    ssum = jnp.sum(st[:, 0, :], axis=0)                      # (Cp,)
    ssq = jnp.sum(st[:, 1, :], axis=0)
    mean = ssum / m
    var = jnp.maximum(ssq / m - mean * mean, 0.0)
    gp = jnp.pad(gamma.astype(jnp.float32), (0, cp - cout))
    bp = jnp.pad(beta.astype(jnp.float32), (0, cp - cout))
    inv = jax.lax.rsqrt(var + _EPS)
    a = (gp * inv).reshape(1, cp)
    b = (bp - mean * gp * inv).reshape(1, cp)
    return dict(y=y, a=a, b=b, n=n, ho=ho, wo=wo, cout=cout,
                m=m, mp=mp, cp=cp, tm=tm, tn=tn)


def _bn_apply(main, *, relu, residual=None, residual_bn=None):
    """Pass 2: BN scale/shift (+ identity residual | + fused shortcut BN) (+ ReLU)."""
    mp, cp, tm, tn = main["mp"], main["cp"], main["tm"], main["tn"]
    m, cout = main["m"], main["cout"]

    args = [main["y"], main["a"], main["b"]]
    in_specs = [pl.BlockSpec((tm, tn), lambda mi, ni: (mi, ni)),
                pl.BlockSpec((1, tn), lambda mi, ni: (0, ni)),
                pl.BlockSpec((1, tn), lambda mi, ni: (0, ni))]

    if residual_bn is not None:
        mode = "bn"
        assert (residual_bn["mp"], residual_bn["cp"],
                residual_bn["tm"], residual_bn["tn"]) == (mp, cp, tm, tn)
        args += [residual_bn["y"], residual_bn["a"], residual_bn["b"]]
        in_specs += [pl.BlockSpec((tm, tn), lambda mi, ni: (mi, ni)),
                     pl.BlockSpec((1, tn), lambda mi, ni: (0, ni)),
                     pl.BlockSpec((1, tn), lambda mi, ni: (0, ni))]
    elif residual is not None:
        mode = "identity"
        rm = _pad2(residual.reshape(m, cout).astype(jnp.float32), mp, cp)
        args.append(rm)
        in_specs.append(pl.BlockSpec((tm, tn), lambda mi, ni: (mi, ni)))
    else:
        mode = "none"

    kernel = functools.partial(_bn_apply_kernel, relu=relu, mode=mode)
    out = pl.pallas_call(
        kernel,
        grid=(mp // tm, cp // tn),
        in_specs=in_specs,
        out_specs=pl.BlockSpec((tm, tn), lambda mi, ni: (mi, ni)),
        out_shape=jax.ShapeDtypeStruct((mp, cp), jnp.float32),
        compiler_params=pltpu.CompilerParams(
            dimension_semantics=("parallel", "parallel"),
            vmem_limit_bytes=_VMEM_LIMIT),
    )(*args)
    return out[:m, :cout].reshape(main["n"], main["ho"], main["wo"], cout)


def conv_bn_act(x, w, gamma, beta, *, stride, pad, relu):
    """Conv2d(bias=False) + BatchNorm2d(train) [+ ReLU]."""
    return _bn_apply(_conv_stats(x, w, gamma, beta, stride=stride, pad=pad),
                     relu=relu)


def max_pool(x, *, k=3, stride=2, pad=1, base_tm=512):
    """nn.MaxPool2d(kernel_size=3, stride=2, padding=1), tiled over output pixels
    with the 9 taps on an inner grid axis (resident running max)."""
    n, _, _, c = x.shape
    # MaxPool implicitly pads with -inf; input is post-ReLU so -1e30 is equivalent.
    patches = _extract_patches(x, k, stride, pad, -1e30)     # (N,Ho,Wo,kk,C)
    _, ho, wo, kk, _ = patches.shape
    m = n * ho * wo
    tm = min(base_tm, _round_up(m, 8))
    mp = _round_up(m, tm)

    taps = jnp.transpose(patches, (3, 0, 1, 2, 4)).reshape(kk, m, c)
    taps = jnp.pad(taps, ((0, 0), (0, mp - m), (0, 0)))

    out = pl.pallas_call(
        _maxpool_kernel,
        grid=(mp // tm, kk),
        in_specs=[pl.BlockSpec((1, tm, c), lambda mi, t: (t, mi, 0))],
        out_specs=pl.BlockSpec((tm, c), lambda mi, t: (mi, 0)),
        out_shape=jax.ShapeDtypeStruct((mp, c), jnp.float32),
        compiler_params=pltpu.CompilerParams(
            dimension_semantics=("parallel", "arbitrary"),
            vmem_limit_bytes=_VMEM_LIMIT),
    )(taps)
    return out[:m].reshape(n, ho, wo, c)


# ---------------------------------------------------------------------------
# ResNet structure (ResNetBasicBlock, expansion = 1)
# ---------------------------------------------------------------------------
def basic_block(x, p):
    ds = p["downsampling"]
    # main path: conv3x3(s=ds)+BN+ReLU, then conv3x3(s=1)+BN (applied in pass 2)
    h = conv_bn_act(x, p["w1"], p["g1"], p["b1"], stride=ds, pad=1, relu=True)
    main = _conv_stats(h, p["w2"], p["g2"], p["b2"], stride=1, pad=1)
    if "ws" in p:
        # shortcut 1x1 conv (stride=ds) + BN — its BN apply is fused into pass 2
        sc = _conv_stats(x, p["ws"], p["gs"], p["bs"], stride=ds, pad=0)
        return _bn_apply(main, relu=True, residual_bn=sc)
    return _bn_apply(main, relu=True, residual=x)


def resnet_encoder_forward(x_nchw, params):
    x = jnp.transpose(x_nchw, (0, 2, 3, 1)).astype(jnp.float32)  # NCHW -> NHWC
    g = params["gate"]
    # gate: Conv2d(k=7, s=2, p=3, bias=False) + BN + ReLU + MaxPool(3, 2, 1)
    x = conv_bn_act(x, g["w"], g["g"], g["b"], stride=2, pad=3, relu=True)
    x = max_pool(x, k=3, stride=2, pad=1)
    for layer in params["layers"]:
        for blk in layer:
            x = basic_block(x, blk)
    return jnp.transpose(x, (0, 3, 1, 2))  # back to NCHW


# ---------------------------------------------------------------------------
# Deterministic parameter init (shapes as in the PyTorch module __init__)
# ---------------------------------------------------------------------------
def _conv_init(key, cout, cin, k):
    fan_in = cin * k * k
    return jax.random.normal(key, (cout, cin, k, k), jnp.float32) * jnp.sqrt(2.0 / fan_in)


def init_encoder_params(key, in_channels, blocks_sizes, depths):
    keys = iter(jax.random.split(key, 128))
    c0 = blocks_sizes[0]
    params = {
        "gate": dict(
            w=_conv_init(next(keys), c0, in_channels, 7),
            g=jnp.ones((c0,), jnp.float32),
            b=jnp.zeros((c0,), jnp.float32),
        )
    }

    def make_block(cin, cout, downsampling):
        p = dict(
            downsampling=downsampling,
            w1=_conv_init(next(keys), cout, cin, 3),
            g1=jnp.ones((cout,), jnp.float32), b1=jnp.zeros((cout,), jnp.float32),
            w2=_conv_init(next(keys), cout, cout, 3),
            g2=jnp.ones((cout,), jnp.float32), b2=jnp.zeros((cout,), jnp.float32),
        )
        if cin != cout:  # should_apply_shortcut (expansion == 1)
            p.update(
                ws=_conv_init(next(keys), cout, cin, 1),
                gs=jnp.ones((cout,), jnp.float32), bs=jnp.zeros((cout,), jnp.float32),
            )
        return p

    layer_io = [(blocks_sizes[0], blocks_sizes[0])] + list(zip(blocks_sizes, blocks_sizes[1:]))
    layers = []
    for (cin, cout), nblk in zip(layer_io, depths):
        ds = 2 if cin != cout else 1
        blocks = [make_block(cin, cout, ds)]
        for _ in range(nblk - 1):
            blocks.append(make_block(cout, cout, 1))
        layers.append(blocks)
    params["layers"] = layers
    return params


if __name__ == "__main__":
    key = jax.random.PRNGKey(0)
    kx, kp = jax.random.split(key)

    in_channels = 3
    blocks_sizes = [16, 32]   # small encoder (same structure as default [64,128,256,512])
    depths = [2, 2]

    x = jax.random.normal(kx, (2, in_channels, 16, 16), jnp.float32)
    params = init_encoder_params(kp, in_channels, blocks_sizes, depths)

    out = resnet_encoder_forward(x, params)
    jax.block_until_ready(out)

    # 16x16 -> gate conv s2 -> 8x8 -> maxpool s2 -> 4x4 -> layer2 s2 -> 2x2
    assert out.shape == (2, blocks_sizes[-1], 2, 2), out.shape
    assert bool(jnp.all(jnp.isfinite(out)))
    print("KERNEL_OK")
</pallas_src>

<mosaic_0001>
module attributes {stable_mosaic.version = 11 : i64} {
  func.func @_matmul_stats_kernel(%arg0: i32, %arg1: i32, %arg2: i32, %arg3: memref<128x256xbf16, #tpu.memory_space<vmem>>, %arg4: memref<256x128xbf16, #tpu.memory_space<vmem>>, %arg5: memref<128x128xbf16, #tpu.memory_space<vmem>>, %arg6: memref<1x8x128xf32, #tpu.memory_space<vmem>>, %arg7: memref<128x128xf32, #tpu.memory_space<vmem>>) attributes {dimension_semantics = [#tpu.dimension_semantics<parallel>, #tpu.dimension_semantics<parallel>, #tpu.dimension_semantics<arbitrary>], iteration_bounds = array<i64: 1, 1, 1>, scalar_prefetch = 0 : i64, scratch_operands = 1 : i64, tpu.core_type = #tpu.core_type<tc>, window_params = [{transform_indices = @transform_0, window_bounds = array<i64: 128, 256>}, {transform_indices = @transform_1, window_bounds = array<i64: 256, 128>}, {transform_indices = @transform_2, window_bounds = array<i64: 128, 128>}, {transform_indices = @transform_3, window_bounds = array<i64: 1, 8, 128>}]} {
    %c0_i32 = arith.constant 0 : i32
    %0 = arith.cmpi eq, %arg2, %c0_i32 : i32
    %1 = arith.extui %0 : i1 to i32
    %c0_i32_0 = arith.constant 0 : i32
    %2 = arith.cmpi ne, %1, %c0_i32_0 : i32
    scf.if %2 {
      %cst_10 = arith.constant 0.000000e+00 : f32
      %12 = vector.broadcast %cst_10 : f32 to vector<128x128xf32>
      %c0_11 = arith.constant 0 : index
      %c0_12 = arith.constant 0 : index
      %13 = vector.load %arg7[%c0_11, %c0_12] : memref<128x128xf32, #tpu.memory_space<vmem>>, vector<128x128xf32>
      tpu.vector_store %arg7[%c0_11, %c0_12], %12 {strides = array<i32>} : memref<128x128xf32, #tpu.memory_space<vmem>>, vector<128x128xf32>,
    } else {
    }
    %c0 = arith.constant 0 : index
    %c0_1 = arith.constant 0 : index
    %3 = vector.load %arg7[%c0, %c0_1] : memref<128x128xf32, #tpu.memory_space<vmem>>, vector<128x128xf32>
    %c0_2 = arith.constant 0 : index
    %c0_3 = arith.constant 0 : index
    %4 = vector.load %arg3[%c0_2, %c0_3] : memref<128x256xbf16, #tpu.memory_space<vmem>>, vector<128x256xbf16>
    %c0_4 = arith.constant 0 : index
    %c0_5 = arith.constant 0 : index
    %5 = vector.load %arg4[%c0_4, %c0_5] : memref<256x128xbf16, #tpu.memory_space<vmem>>, vector<256x128xbf16>
    %cst = arith.constant dense<0.000000e+00> : vector<128x128xf32>
    %6 = tpu.matmul %4, %5, %cst {dimension_numbers = #tpu.dot_dimension_numbers<[1], [0], [0], [1], [0, 0, 1, 1], [], []>} : vector<128x256xbf16>, vector<256x128xbf16>, vector<128x128xf32> -> vector<128x128xf32>
    %7 = arith.addf %3, %6 : vector<128x128xf32>
    %c0_6 = arith.constant 0 : index
    %c0_7 = arith.constant 0 : index
    %8 = vector.load %arg7[%c0_6, %c0_7] : memref<128x128xf32, #tpu.memory_space<vmem>>, vector<128x128xf32>
    tpu.vector_store %arg7[%c0_6, %c0_7], %7 {strides = array<i32>} : memref<128x128xf32, #tpu.memory_space<vmem>>, vector<128x128xf32>,
    %c0_i32_8 = arith.constant 0 : i32
    %9 = arith.cmpi eq, %arg2, %c0_i32_8 : i32
    %10 = arith.extui %9 : i1 to i32
    %c0_i32_9 = arith.constant 0 : i32
    %11 = arith.cmpi ne, %10, %c0_i32_9 : i32
    scf.if %11 {
      %c0_10 = arith.constant 0 : index
      %c0_11 = arith.constant 0 : index
      %12 = vector.load %arg7[%c0_10, %c0_11] : memref<128x128xf32, #tpu.memory_space<vmem>>, vector<128x128xf32>
      %13 = arith.truncf %12 : vector<128x128xf32> to vector<128x128xbf16>
      %c0_12 = arith.constant 0 : index
      %c0_13 = arith.constant 0 : index
      %14 = vector.load %arg5[%c0_12, %c0_13] : memref<128x128xbf16, #tpu.memory_space<vmem>>, vector<128x128xbf16>
      tpu.vector_store %arg5[%c0_12, %c0_13], %13 {strides = array<i32>} : memref<128x128xbf16, #tpu.memory_space<vmem>>, vector<128x128xbf16>,
      %cst_14 = arith.constant dense<0.000000e+00> : vector<128xf32>
      %15 = vector.multi_reduction <add>, %12, %cst_14 [0] : vector<128x128xf32> to vector<128xf32>
      %16 = vector.shape_cast %15 : vector<128xf32> to vector<1x128xf32>
      %17 = arith.mulf %12, %12 : vector<128x128xf32>
      %cst_15 = arith.constant dense<0.000000e+00> : vector<128xf32>
      %18 = vector.multi_reduction <add>, %17, %cst_15 [0] : vector<128x128xf32> to vector<128xf32>
      %19 = vector.shape_cast %18 : vector<128xf32> to vector<1x128xf32>
      %cst_16 = arith.constant 0.000000e+00 : f32
      %20 = vector.broadcast %cst_16 : f32 to vector<6x128xf32>
      %21 = tpu.concatenate %16, %19, %20 in 0 : vector<1x128xf32>, vector<1x128xf32>, vector<6x128xf32> -> vector<8x128xf32>
      %22 = vector.shape_cast %21 : vector<8x128xf32> to vector<1x8x128xf32>
      %c0_17 = arith.constant 0 : index
      %c0_18 = arith.constant 0 : index
      %c0_19 = arith.constant 0 : index
      %23 = vector.load %arg6[%c0_17, %c0_18, %c0_19] : memref<1x8x128xf32, #tpu.memory_space<vmem>>, vector<1x8x128xf32>
      tpu.vector_store %arg6[%c0_17, %c0_18, %c0_19], %22 {strides = array<i32>} : memref<1x8x128xf32, #tpu.memory_space<vmem>>, vector<1x8x128xf32>,
    } else {
    }
    return
  }
  func.func @transform_0(%arg0: i32, %arg1: i32, %arg2: i32) -> (i32, i32) {
    %c0_i32 = arith.constant 0 : i32
    return %arg0, %arg2 : i32, i32
  }
  func.func @transform_1(%arg0: i32, %arg1: i32, %arg2: i32) -> (i32, i32) {
    %c0_i32 = arith.constant 0 : i32
    return %arg2, %arg1 : i32, i32
  }
  func.func @transform_2(%arg0: i32, %arg1: i32, %arg2: i32) -> (i32, i32) {
    %c0_i32 = arith.constant 0 : i32
    return %arg0, %arg1 : i32, i32
  }
  func.func @transform_3(%arg0: i32, %arg1: i32, %arg2: i32) -> (i32, i32, i32) {
    %c0_i32 = arith.constant 0 : i32
    %c0_i32_0 = arith.constant 0 : i32
    return %arg0, %c0_i32, %arg1 : i32, i32, i32
  }
}

</mosaic_0001>

<llo_original>
// kernel: tpu_custom_call.1
$region0: #{tpu_custom_call.1}
  #allocation0 [shape = 'u32[]', space=smem, size = 0x4, offset = 0x4, fixed_abs, tag = 'smem constant byte address 0x4 - core index']
  #allocation1 [shape = 'u32[72,128]{1,0:T(1,128)}', space=vmem, size = 0x9000, scoped, tag = 'internal scratch']
  #allocation2 [shape = 'f32[128,128]{1,0:T(8,128)}', space=vmem, size = 0x10000, scoped, tag = 'scratch operand']
  %s0 = inlined_call_operand.hbm [shape: bf16[128,256], index: 0, kind: input, shape index: {}]
  %s1 = inlined_call_operand.hbm [shape: bf16[256,128], index: 1, kind: input, shape index: {}]
  %s2 = inlined_call_operand.hbm [shape: bf16[128,128], index: 2, kind: output, shape index: {0}]
  %s3 = inlined_call_operand.hbm [shape: f32[1,8,128], index: 3, kind: output, shape index: {1}]
  %4 = xla_tuple %s2, %s3
  %s5 = sld [smem:[#allocation0]]
  $region42: #{tpu_custom_call.1} parent=0
    _
  %s7 = ssub.s32 1, %s5
  %s8 = scalar_select 0, %s7, %s5
  $region1: #{tpu_custom_call.1} parent=0
    #allocation3 [shape = 'u8[65536]{0}', space=vmem, size = 0x10000, scoped, tag = 'input window, operand 0, single buffered']
    #allocation4 [shape = 's32[1]{0}', space=sflag, size = 0x4, scoped, tag = 'scoped memory for tpu_custom_call.1']
    #allocation5 [shape = 's32[1]{0}', space=sflag, size = 0x4, scoped, tag = 'scoped memory for tpu_custom_call.1']
    #allocation6 [shape = 'u8[65536]{0}', space=vmem, size = 0x10000, scoped, tag = 'input window, operand 1, single buffered']
    #allocation7 [shape = 's32[1]{0}', space=sflag, size = 0x4, scoped, tag = 'scoped memory for tpu_custom_call.1']
    #allocation8 [shape = 'u8[32768]{0}', space=vmem, size = 0x8000, scoped, tag = 'output window, operand 0, single buffered']
    #allocation9 [shape = 'u8[4096]{0}', space=vmem, size = 0x1000, scoped, tag = 'output window, operand 1, single buffered']
    #allocation10 [shape = 's32[1]{0}', space=sflag, size = 0x4, scoped, tag = 'scoped memory for tpu_custom_call.1']
    %9 = vsyncpa [#allocation4], 0
    %10 = vsyncpa [#allocation7], 0
    %11 = vsyncpa [#allocation5], 0
    %12 = vsyncpa [#allocation10], 0
    // Predicated region
    $region2: #{tpu_custom_call.1} parent=1 // pred_check
      _
    $region3: #{tpu_custom_call.1} parent=1 // pred_check_branch
      %14 = sbr.rel (0) target = $region5
    $region4: #{tpu_custom_call.1} parent=1 // pred_region
      %16 = vsyncadd [#allocation4], 0
      %s17 = sshll.u32 %s0, 4
      %s18 = int_to_ptr.hbm [resolvable:$true] %s17
      %s19 = sshll.u32 [#allocation3], 4
      %s20 = int_to_ptr.vmem [resolvable:$true] %s19
      %25 = dma.hbm_to_vmem [thread:$0]  %s18, 2048, %s20, [#allocation4], 128, 128, 8
    $region5: #{tpu_custom_call.1} parent=1 // pred_fallthru
      _
    // Predicated region
    $region6: #{tpu_custom_call.1} parent=1 // pred_check
      _
    $region7: #{tpu_custom_call.1} parent=1 // pred_check_branch
      %27 = sbr.rel (0) target = $region9
    $region8: #{tpu_custom_call.1} parent=1 // pred_region
      %29 = vsyncadd [#allocation7], 0
      %s30 = sshll.u32 %s1, 4
      %s31 = int_to_ptr.hbm [resolvable:$true] %s30
      %s32 = sshll.u32 [#allocation6], 4
      %s33 = int_to_ptr.vmem [resolvable:$true] %s32
      %38 = dma.hbm_to_vmem [thread:$0]  %s31, 2048, %s33, [#allocation7], 64, 64, 4
    $region9: #{tpu_custom_call.1} parent=1 // pred_fallthru
      _
    // Predicated region
    $region10: #{tpu_custom_call.1} parent=1 // pred_check
      _
    $region11: #{tpu_custom_call.1} parent=1 // pred_check_branch
      %40 = sbr.rel (0) target = $region13
    $region12: #{tpu_custom_call.1} parent=1 // pred_region
      %42 = dma.done [#allocation4], 2048
    $region13: #{tpu_custom_call.1} parent=1 // pred_fallthru
      _
    // Predicated region
    $region14: #{tpu_custom_call.1} parent=1 // pred_check
      _
    $region15: #{tpu_custom_call.1} parent=1 // pred_check_branch
      %44 = sbr.rel (0) target = $region17
    $region16: #{tpu_custom_call.1} parent=1 // pred_region
      %46 = dma.done [#allocation7], 2048
    $region17: #{tpu_custom_call.1} parent=1 // pred_fallthru
      _
    %p47 = scmp.eq.s32.totalorder 0, 0
    // Predicated region
    $region18: #{tpu_custom_call.1} parent=1 // pred_check
      %p48 = pneg %p47
    $region19: #{tpu_custom_call.1} parent=1 // pred_check_branch
      %50 = sbr.rel (%p48) target = $region21
    $region20: #{tpu_custom_call.1} parent=1 // pred_region
      %51 = vst [vmem:[#allocation2] sm:$0xff] 0.0
      %52 = vst [vmem:[#allocation2 + $0x8] sm:$0xff] 0.0
      %53 = vst [vmem:[#allocation2 + $0x10] sm:$0xff] 0.0
      %54 = vst [vmem:[#allocation2 + $0x18] sm:$0xff] 0.0
      %55 = vst [vmem:[#allocation2 + $0x20] sm:$0xff] 0.0
      %56 = vst [vmem:[#allocation2 + $0x28] sm:$0xff] 0.0
      %57 = vst [vmem:[#allocation2 + $0x30] sm:$0xff] 0.0
      %58 = vst [vmem:[#allocation2 + $0x38] sm:$0xff] 0.0
      %59 = vst [vmem:[#allocation2 + $0x40] sm:$0xff] 0.0
      %60 = vst [vmem:[#allocation2 + $0x48] sm:$0xff] 0.0
      %61 = vst [vmem:[#allocation2 + $0x50] sm:$0xff] 0.0
      %62 = vst [vmem:[#allocation2 + $0x58] sm:$0xff] 0.0
      %63 = vst [vmem:[#allocation2 + $0x60] sm:$0xff] 0.0
      %64 = vst [vmem:[#allocation2 + $0x68] sm:$0xff] 0.0
      %65 = vst [vmem:[#allocation2 + $0x70] sm:$0xff] 0.0
      %66 = vst [vmem:[#allocation2 + $0x78] sm:$0xff] 0.0
    $region21: #{tpu_custom_call.1} parent=1 // pred_fallthru
      _
    %v67 = vld [vmem:[#allocation2] sm:$0xff]
    %v68 = vld [vmem:[#allocation2 + $0x8] sm:$0xff]
    %v69 = vld [vmem:[#allocation2 + $0x10] sm:$0xff]
    %v70 = vld [vmem:[#allocation2 + $0x18] sm:$0xff]
    %v71 = vld [vmem:[#allocation2 + $0x20] sm:$0xff]
    %v72 = vld [vmem:[#allocation2 + $0x28] sm:$0xff]
    %v73 = vld [vmem:[#allocation2 + $0x30] sm:$0xff]
    %v74 = vld [vmem:[#allocation2 + $0x38] sm:$0xff]
    %v75 = vld [vmem:[#allocation2 + $0x40] sm:$0xff]
    %v76 = vld [vmem:[#allocation2 + $0x48] sm:$0xff]
    %v77 = vld [vmem:[#allocation2 + $0x50] sm:$0xff]
    %v78 = vld [vmem:[#allocation2 + $0x58] sm:$0xff]
    %v79 = vld [vmem:[#allocation2 + $0x60] sm:$0xff]
    %v80 = vld [vmem:[#allocation2 + $0x68] sm:$0xff]
    %v81 = vld [vmem:[#allocation2 + $0x70] sm:$0xff]
    %v82 = vld [vmem:[#allocation2 + $0x78] sm:$0xff]
    %v83 = vld [vmem:[#allocation3] sm:$0xff]
    %v84 = vld [vmem:[#allocation3 + $0x8] sm:$0xff]
    %v85 = vld [vmem:[#allocation3 + $0x10] sm:$0xff]
    %v86 = vld [vmem:[#allocation3 + $0x18] sm:$0xff]
    %v87 = vld [vmem:[#allocation3 + $0x20] sm:$0xff]
    %v88 = vld [vmem:[#allocation3 + $0x28] sm:$0xff]
    %v89 = vld [vmem:[#allocation3 + $0x30] sm:$0xff]
    %v90 = vld [vmem:[#allocation3 + $0x38] sm:$0xff]
    %v91 = vld [vmem:[#allocation3 + $0x40] sm:$0xff]
    %v92 = vld [vmem:[#allocation3 + $0x48] sm:$0xff]
    %v93 = vld [vmem:[#allocation3 + $0x50] sm:$0xff]
    %v94 = vld [vmem:[#allocation3 + $0x58] sm:$0xff]
    %v95 = vld [vmem:[#allocation3 + $0x60] sm:$0xff]
    %v96 = vld [vmem:[#allocation3 + $0x68] sm:$0xff]
    %v97 = vld [vmem:[#allocation3 + $0x70] sm:$0xff]
    %v98 = vld [vmem:[#allocation3 + $0x78] sm:$0xff]
    %v99 = vld [vmem:[#allocation6] sm:$0xf]
    %v100 = vld [vmem:[#allocation6 + $0x4] sm:$0xf]
    %v101 = vld [vmem:[#allocation6 + $0x8] sm:$0xf]
    %v102 = vld [vmem:[#allocation6 + $0xc] sm:$0xf]
    %v103 = vld [vmem:[#allocation6 + $0x10] sm:$0xf]
    %v104 = vld [vmem:[#allocation6 + $0x14] sm:$0xf]
    %v105 = vld [vmem:[#allocation6 + $0x18] sm:$0xf]
    %v106 = vld [vmem:[#allocation6 + $0x1c] sm:$0xf]
    %v107 = vld [vmem:[#allocation6 + $0x20] sm:$0xf]
    %v108 = vld [vmem:[#allocation6 + $0x24] sm:$0xf]
    %v109 = vld [vmem:[#allocation6 + $0x28] sm:$0xf]
    %v110 = vld [vmem:[#allocation6 + $0x2c] sm:$0xf]
    %v111 = vld [vmem:[#allocation6 + $0x30] sm:$0xf]
    %v112 = vld [vmem:[#allocation6 + $0x34] sm:$0xf]
    %v113 = vld [vmem:[#allocation6 + $0x38] sm:$0xf]
    %v114 = vld [vmem:[#allocation6 + $0x3c] sm:$0xf]
    %v115 = vld [vmem:[#allocation6 + $0x40] sm:$0xf]
    %v116 = vld [vmem:[#allocation6 + $0x44] sm:$0xf]
    %v117 = vld [vmem:[#allocation6 + $0x48] sm:$0xf]
    %v118 = vld [vmem:[#allocation6 + $0x4c] sm:$0xf]
    %v119 = vld [vmem:[#allocation6 + $0x50] sm:$0xf]
    %v120 = vld [vmem:[#allocation6 + $0x54] sm:$0xf]
    %v121 = vld [vmem:[#allocation6 + $0x58] sm:$0xf]
    %v122 = vld [vmem:[#allocation6 + $0x5c] sm:$0xf]
    %v123 = vld [vmem:[#allocation6 + $0x60] sm:$0xf]
    %v124 = vld [vmem:[#allocation6 + $0x64] sm:$0xf]
    %v125 = vld [vmem:[#allocation6 + $0x68] sm:$0xf]
    %v126 = vld [vmem:[#allocation6 + $0x6c] sm:$0xf]
    %v127 = vld [vmem:[#allocation6 + $0x70] sm:$0xf]
    %v128 = vld [vmem:[#allocation6 + $0x74] sm:$0xf]
    %v129 = vld [vmem:[#allocation6 + $0x78] sm:$0xf]
    %v130 = vld [vmem:[#allocation6 + $0x7c] sm:$0xf]
    %v147 = vunpack.c.l.b16 %v83
    %v148 = vunpack.c.h.b16 %v83
    %v149 = vunpack.c.l.b16 %v84
    %v150 = vunpack.c.h.b16 %v84
    %v151 = vunpack.c.l.b16 %v85
    %v152 = vunpack.c.h.b16 %v85
    %v153 = vunpack.c.l.b16 %v86
    %v154 = vunpack.c.h.b16 %v86
    %v155 = vunpack.c.l.b16 %v87
    %v156 = vunpack.c.h.b16 %v87
    %v157 = vunpack.c.l.b16 %v88
    %v158 = vunpack.c.h.b16 %v88
    %v159 = vunpack.c.l.b16 %v89
    %v160 = vunpack.c.h.b16 %v89
    %v161 = vunpack.c.l.b16 %v90
    %v162 = vunpack.c.h.b16 %v90
    %v163 = vunpack.c.l.b16 %v91
    %v164 = vunpack.c.h.b16 %v91
    %v165 = vunpack.c.l.b16 %v92
    %v166 = vunpack.c.h.b16 %v92
    %v167 = vunpack.c.l.b16 %v93
    %v168 = vunpack.c.h.b16 %v93
    %v169 = vunpack.c.l.b16 %v94
    %v170 = vunpack.c.h.b16 %v94
    %v171 = vunpack.c.l.b16 %v95
    %v172 = vunpack.c.h.b16 %v95
    %v173 = vunpack.c.l.b16 %v96
    %v174 = vunpack.c.h.b16 %v96
    %v175 = vunpack.c.l.b16 %v97
    %v176 = vunpack.c.h.b16 %v97
    %v177 = vunpack.c.l.b16 %v98
    %v178 = vunpack.c.h.b16 %v98
    %v179 = vpack.c.b16 %v149, %v147
    %v180 = vpack.c.b16 %v150, %v148
    %v181 = vpack.c.b16 %v153, %v151
    %v182 = vpack.c.b16 %v154, %v152
    %v183 = vpack.c.b16 %v157, %v155
    %v184 = vpack.c.b16 %v158, %v156
    %v185 = vpack.c.b16 %v161, %v159
    %v186 = vpack.c.b16 %v162, %v160
    %v187 = vpack.c.b16 %v165, %v163
    %v188 = vpack.c.b16 %v166, %v164
    %v189 = vpack.c.b16 %v169, %v167
    %v190 = vpack.c.b16 %v170, %v168
    %v191 = vpack.c.b16 %v173, %v171
    %v192 = vpack.c.b16 %v174, %v172
    %v193 = vpack.c.b16 %v177, %v175
    %v194 = vpack.c.b16 %v178, %v176
    %v243 = vunpack.c.l.b16 %v99
    %v244 = vunpack.c.l.b16 %v100
    %v245 = vunpack.c.l.b16 %v101
    %v246 = vunpack.c.l.b16 %v102
    %v247 = vunpack.c.l.b16 %v103
    %v248 = vunpack.c.l.b16 %v104
    %v249 = vunpack.c.l.b16 %v105
    %v250 = vunpack.c.l.b16 %v106
    %v251 = vunpack.c.l.b16 %v107
    %v252 = vunpack.c.l.b16 %v108
    %v253 = vunpack.c.l.b16 %v109
    %v254 = vunpack.c.l.b16 %v110
    %v255 = vunpack.c.l.b16 %v111
    %v256 = vunpack.c.l.b16 %v112
    %v257 = vunpack.c.l.b16 %v113
    %v258 = vunpack.c.l.b16 %v114
    %v259 = vunpack.c.l.b16 %v115
    %v260 = vunpack.c.l.b16 %v116
    %v261 = vunpack.c.l.b16 %v117
    %v262 = vunpack.c.l.b16 %v118
    %v263 = vunpack.c.l.b16 %v119
    %v264 = vunpack.c.l.b16 %v120
    %v265 = vunpack.c.l.b16 %v121
    %v266 = vunpack.c.l.b16 %v122
    %v267 = vunpack.c.l.b16 %v123
    %v268 = vunpack.c.l.b16 %v124
    %v269 = vunpack.c.l.b16 %v125
    %v270 = vunpack.c.l.b16 %v126
    %v271 = vunpack.c.l.b16 %v127
    %v272 = vunpack.c.l.b16 %v128
    %v273 = vunpack.c.l.b16 %v129
    %v274 = vunpack.c.l.b16 %v130
    %v275 = vpack.c.b16 %v244, %v243
    %v276 = vpack.c.b16 %v246, %v245
    %v277 = vpack.c.b16 %v248, %v247
    %v278 = vpack.c.b16 %v250, %v249
    %v279 = vpack.c.b16 %v252, %v251
    %v280 = vpack.c.b16 %v254, %v253
    %v281 = vpack.c.b16 %v256, %v255
    %v282 = vpack.c.b16 %v258, %v257
    %v283 = vpack.c.b16 %v260, %v259
    %v284 = vpack.c.b16 %v262, %v261
    %v285 = vpack.c.b16 %v264, %v263
    %v286 = vpack.c.b16 %v266, %v265
    %v287 = vpack.c.b16 %v268, %v267
    %v288 = vpack.c.b16 %v270, %v269
    %v289 = vpack.c.b16 %v272, %v271
    %v290 = vpack.c.b16 %v274, %v273
    %307 = vmatpush.bf16.msra.mxu0 %v282
    %308 = vmatpush.bf16.msra.mxu0 %v281
    %309 = vmatpush.bf16.msra.mxu0 %v280
    %310 = vmatpush.bf16.msra.mxu0 %v279
    %311 = vmatpush.bf16.msra.mxu0 %v278
    %312 = vmatpush.bf16.msra.mxu0 %v277
    %313 = vmatpush.bf16.msra.mxu0 %v276
    %314 = vmatpush.bf16.msra.mxu0 %v275
    %315 = vmatmul.bf16.gmra.mxu0 %v179
    %v316 = vpop.f32.mrf.mxu0
    %v317 = vadd.f32 0.0, %v316
    %v318 = vpop.f32.mrf.mxu0
    %v319 = vadd.f32 0.0, %v318
    %320 = vmatmul.bf16.gmra.mxu0 %v181
    %v321 = vpop.f32.mrf.mxu0
    %v322 = vadd.f32 0.0, %v321
    %v323 = vpop.f32.mrf.mxu0
    %v324 = vadd.f32 0.0, %v323
    %325 = vmatmul.bf16.gmra.mxu0 %v183
    %v326 = vpop.f32.mrf.mxu0
    %v327 = vadd.f32 0.0, %v326
    %v328 = vpop.f32.mrf.mxu0
    %v329 = vadd.f32 0.0, %v328
    %330 = vmatmul.bf16.gmra.mxu0 %v185
    %v331 = vpop.f32.mrf.mxu0
    %v332 = vadd.f32 0.0, %v331
    %v333 = vpop.f32.mrf.mxu0
    %v334 = vadd.f32 0.0, %v333
    %335 = vmatmul.bf16.gmra.mxu0 %v187
    %v336 = vpop.f32.mrf.mxu0
    %v337 = vadd.f32 0.0, %v336
    %v338 = vpop.f32.mrf.mxu0
    %v339 = vadd.f32 0.0, %v338
    %340 = vmatmul.bf16.gmra.mxu0 %v189
    %v341 = vpop.f32.mrf.mxu0
    %v342 = vadd.f32 0.0, %v341
    %v343 = vpop.f32.mrf.mxu0
    %v344 = vadd.f32 0.0, %v343
    %345 = vmatmul.bf16.gmra.mxu0 %v191
    %v346 = vpop.f32.mrf.mxu0
    %v347 = vadd.f32 0.0, %v346
    %v348 = vpop.f32.mrf.mxu0
    %v349 = vadd.f32 0.0, %v348
    %350 = vmatmul.bf16.gmra.mxu0 %v193
    %v351 = vpop.f32.mrf.mxu0
    %v352 = vadd.f32 0.0, %v351
    %v353 = vpop.f32.mrf.mxu0
    %v354 = vadd.f32 0.0, %v353
    %355 = vdwg.mxu0
    %356 = vmatpush.bf16.msra.mxu0 %v290
    %357 = vmatpush.bf16.msra.mxu0 %v289
    %358 = vmatpush.bf16.msra.mxu0 %v288
    %359 = vmatpush.bf16.msra.mxu0 %v287
    %360 = vmatpush.bf16.msra.mxu0 %v286
    %361 = vmatpush.bf16.msra.mxu0 %v285
    %362 = vmatpush.bf16.msra.mxu0 %v284
    %363 = vmatpush.bf16.msra.mxu0 %v283
    %364 = vmatmul.bf16.gmra.mxu0 %v180
    %v365 = vpop.f32.mrf.mxu0
    %v366 = vadd.f32 %v317, %v365
    %v367 = vpop.f32.mrf.mxu0
    %v368 = vadd.f32 %v319, %v367
    %369 = vmatmul.bf16.gmra.mxu0 %v182
    %v370 = vpop.f32.mrf.mxu0
    %v371 = vadd.f32 %v322, %v370
    %v372 = vpop.f32.mrf.mxu0
    %v373 = vadd.f32 %v324, %v372
    %374 = vmatmul.bf16.gmra.mxu0 %v184
    %v375 = vpop.f32.mrf.mxu0
    %v376 = vadd.f32 %v327, %v375
    %v377 = vpop.f32.mrf.mxu0
    %v378 = vadd.f32 %v329, %v377
    %379 = vmatmul.bf16.gmra.mxu0 %v186
    %v380 = vpop.f32.mrf.mxu0
    %v381 = vadd.f32 %v332, %v380
    %v382 = vpop.f32.mrf.mxu0
    %v383 = vadd.f32 %v334, %v382
    %384 = vmatmul.bf16.gmra.mxu0 %v188
    %v385 = vpop.f32.mrf.mxu0
    %v386 = vadd.f32 %v337, %v385
    %v387 = vpop.f32.mrf.mxu0
    %v388 = vadd.f32 %v339, %v387
    %389 = vmatmul.bf16.gmra.mxu0 %v190
    %v390 = vpop.f32.mrf.mxu0
    %v391 = vadd.f32 %v342, %v390
    %v392 = vpop.f32.mrf.mxu0
    %v393 = vadd.f32 %v344, %v392
    %394 = vmatmul.bf16.gmra.mxu0 %v192
    %v395 = vpop.f32.mrf.mxu0
    %v396 = vadd.f32 %v347, %v395
    %v397 = vpop.f32.mrf.mxu0
    %v398 = vadd.f32 %v349, %v397
    %399 = vmatmul.bf16.gmra.mxu0 %v194
    %v400 = vpop.f32.mrf.mxu0
    %v401 = vadd.f32 %v352, %v400
    %v402 = vpop.f32.mrf.mxu0
    %v403 = vadd.f32 %v354, %v402
    %404 = vdwg.mxu0
    %v405 = vadd.f32 %v67, %v366
    %v406 = vadd.f32 %v68, %v368
    %v407 = vadd.f32 %v69, %v371
    %v408 = vadd.f32 %v70, %v373
    %v409 = vadd.f32 %v71, %v376
    %v410 = vadd.f32 %v72, %v378
    %v411 = vadd.f32 %v73, %v381
    %v412 = vadd.f32 %v74, %v383
    %v413 = vadd.f32 %v75, %v386
    %v414 = vadd.f32 %v76, %v388
    %v415 = vadd.f32 %v77, %v391
    %v416 = vadd.f32 %v78, %v393
    %v417 = vadd.f32 %v79, %v396
    %v418 = vadd.f32 %v80, %v398
    %v419 = vadd.f32 %v81, %v401
    %v420 = vadd.f32 %v82, %v403
    %421 = vst [vmem:[#allocation2] sm:$0xff] %v405
    %422 = vst [vmem:[#allocation2 + $0x8] sm:$0xff] %v406
    %423 = vst [vmem:[#allocation2 + $0x10] sm:$0xff] %v407
    %424 = vst [vmem:[#allocation2 + $0x18] sm:$0xff] %v408
    %425 = vst [vmem:[#allocation2 + $0x20] sm:$0xff] %v409
    %426 = vst [vmem:[#allocation2 + $0x28] sm:$0xff] %v410
    %427 = vst [vmem:[#allocation2 + $0x30] sm:$0xff] %v411
    %428 = vst [vmem:[#allocation2 + $0x38] sm:$0xff] %v412
    %429 = vst [vmem:[#allocation2 + $0x40] sm:$0xff] %v413
    %430 = vst [vmem:[#allocation2 + $0x48] sm:$0xff] %v414
    %431 = vst [vmem:[#allocation2 + $0x50] sm:$0xff] %v415
    %432 = vst [vmem:[#allocation2 + $0x58] sm:$0xff] %v416
    %433 = vst [vmem:[#allocation2 + $0x60] sm:$0xff] %v417
    %434 = vst [vmem:[#allocation2 + $0x68] sm:$0xff] %v418
    %435 = vst [vmem:[#allocation2 + $0x70] sm:$0xff] %v419
    %436 = vst [vmem:[#allocation2 + $0x78] sm:$0xff] %v420
    // Predicated region
    $region22: #{tpu_custom_call.1} parent=1 // pred_check
      %p437 = pneg %p47
    $region23: #{tpu_custom_call.1} parent=1 // pred_check_branch
      %439 = sbr.rel (%p437) target = $region25
    $region24: #{tpu_custom_call.1} parent=1 // pred_region
      %v440 = vld [vmem:[#allocation2] sm:$0xff]
      %v441 = vld [vmem:[#allocation2 + $0x8] sm:$0xff]
      %v442 = vld [vmem:[#allocation2 + $0x10] sm:$0xff]
      %v443 = vld [vmem:[#allocation2 + $0x18] sm:$0xff]
      %v444 = vld [vmem:[#allocation2 + $0x20] sm:$0xff]
      %v445 = vld [vmem:[#allocation2 + $0x28] sm:$0xff]
      %v446 = vld [vmem:[#allocation2 + $0x30] sm:$0xff]
      %v447 = vld [vmem:[#allocation2 + $0x38] sm:$0xff]
      %v448 = vld [vmem:[#allocation2 + $0x40] sm:$0xff]
      %v449 = vld [vmem:[#allocation2 + $0x48] sm:$0xff]
      %v450 = vld [vmem:[#allocation2 + $0x50] sm:$0xff]
      %v451 = vld [vmem:[#allocation2 + $0x58] sm:$0xff]
      %v452 = vld [vmem:[#allocation2 + $0x60] sm:$0xff]
      %v453 = vld [vmem:[#allocation2 + $0x68] sm:$0xff]
      %v454 = vld [vmem:[#allocation2 + $0x70] sm:$0xff]
      %v455 = vld [vmem:[#allocation2 + $0x78] sm:$0xff]
      %v456 = vpack.c.bf16 %v440, %v440
      %v457 = vpack.c.bf16 %v441, %v441
      %v458 = vpack.c.bf16 %v442, %v442
      %v459 = vpack.c.bf16 %v443, %v443
      %v460 = vpack.c.bf16 %v444, %v444
      %v461 = vpack.c.bf16 %v445, %v445
      %v462 = vpack.c.bf16 %v446, %v446
      %v463 = vpack.c.bf16 %v447, %v447
      %v464 = vpack.c.bf16 %v448, %v448
      %v465 = vpack.c.bf16 %v449, %v449
      %v466 = vpack.c.bf16 %v450, %v450
      %v467 = vpack.c.bf16 %v451, %v451
      %v468 = vpack.c.bf16 %v452, %v452
      %v469 = vpack.c.bf16 %v453, %v453
      %v470 = vpack.c.bf16 %v454, %v454
      %v471 = vpack.c.bf16 %v455, %v455
      %472 = vst [vmem:[#allocation8] sm:$0xf] %v456
      %473 = vst [vmem:[#allocation8 + $0x4] sm:$0xf] %v457
      %474 = vst [vmem:[#allocation8 + $0x8] sm:$0xf] %v458
      %475 = vst [vmem:[#allocation8 + $0xc] sm:$0xf] %v459
      %476 = vst [vmem:[#allocation8 + $0x10] sm:$0xf] %v460
      %477 = vst [vmem:[#allocation8 + $0x14] sm:$0xf] %v461
      %478 = vst [vmem:[#allocation8 + $0x18] sm:$0xf] %v462
      %479 = vst [vmem:[#allocation8 + $0x1c] sm:$0xf] %v463
      %480 = vst [vmem:[#allocation8 + $0x20] sm:$0xf] %v464
      %481 = vst [vmem:[#allocation8 + $0x24] sm:$0xf] %v465
      %482 = vst [vmem:[#allocation8 + $0x28] sm:$0xf] %v466
      %483 = vst [vmem:[#allocation8 + $0x2c] sm:$0xf] %v467
      %484 = vst [vmem:[#allocation8 + $0x30] sm:$0xf] %v468
      %485 = vst [vmem:[#allocation8 + $0x34] sm:$0xf] %v469
      %486 = vst [vmem:[#allocation8 + $0x38] sm:$0xf] %v470
      %487 = vst [vmem:[#allocation8 + $0x3c] sm:$0xf] %v471
      %v488 = vadd.f32 %v440, %v441
      %v489 = vadd.f32 %v488, %v442
      %v490 = vadd.f32 %v489, %v443
      %v491 = vadd.f32 %v490, %v444
      %v492 = vadd.f32 %v491, %v445
      %v493 = vadd.f32 %v492, %v446
      %v494 = vadd.f32 %v493, %v447
      %v495 = vadd.f32 %v494, %v448
      %v496 = vadd.f32 %v495, %v449
      %v497 = vadd.f32 %v496, %v450
      %v498 = vadd.f32 %v497, %v451
      %v499 = vadd.f32 %v498, %v452
      %v500 = vadd.f32 %v499, %v453
      %v501 = vadd.f32 %v500, %v454
      %v502 = vadd.f32 %v501, %v455
      %v503 = vrot.slane %v502, 4
      %v504 = vadd.f32 %v502, %v503
      %v505 = vrot.slane %v504, 2
      %v506 = vadd.f32 %v504, %v505
      %v507 = vrot.slane %v506, 1
      %v508 = vadd.f32 %v506, %v507
      %v509 = vmul.f32 %v440, %v440
      %v510 = vmul.f32 %v441, %v441
      %v511 = vmul.f32 %v442, %v442
      %v512 = vmul.f32 %v443, %v443
      %v513 = vmul.f32 %v444, %v444
      %v514 = vmul.f32 %v445, %v445
      %v515 = vmul.f32 %v446, %v446
      %v516 = vmul.f32 %v447, %v447
      %v517 = vmul.f32 %v448, %v448
      %v518 = vmul.f32 %v449, %v449
      %v519 = vmul.f32 %v450, %v450
      %v520 = vmul.f32 %v451, %v451
      %v521 = vmul.f32 %v452, %v452
      %v522 = vmul.f32 %v453, %v453
      %v523 = vmul.f32 %v454, %v454
      %v524 = vmul.f32 %v455, %v455
      %v525 = vadd.f32 %v509, %v510
      %v526 = vadd.f32 %v525, %v511
      %v527 = vadd.f32 %v526, %v512
      %v528 = vadd.f32 %v527, %v513
      %v529 = vadd.f32 %v528, %v514
      %v530 = vadd.f32 %v529, %v515
      %v531 = vadd.f32 %v530, %v516
      %v532 = vadd.f32 %v531, %v517
      %v533 = vadd.f32 %v532, %v518
      %v534 = vadd.f32 %v533, %v519
      %v535 = vadd.f32 %v534, %v520
      %v536 = vadd.f32 %v535, %v521
      %v537 = vadd.f32 %v536, %v522
      %v538 = vadd.f32 %v537, %v523
      %v539 = vadd.f32 %v538, %v524
      %v540 = vrot.slane %v539, 4
      %v541 = vadd.f32 %v539, %v540
      %v542 = vrot.slane %v541, 2
      %v543 = vadd.f32 %v541, %v542
      %v544 = vrot.slane %v543, 1
      %v545 = vadd.f32 %v543, %v544
      %vm546 = vcmask 1040384
      %v547 = vsel %vm546, %v508, %v545
      %vm548 = vcmask 1041408
      %v549 = vsel %vm548, %v547, 0.0
      %550 = vst [vmem:[#allocation9] sm:$0xff] %v549
    $region25: #{tpu_custom_call.1} parent=1 // pred_fallthru
      _
    // Predicated region
    $region26: #{tpu_custom_call.1} parent=1 // pred_check
      _
    $region27: #{tpu_custom_call.1} parent=1 // pred_check_branch
      %552 = sbr.rel (0) target = $region29
    $region28: #{tpu_custom_call.1} parent=1 // pred_region
      %554 = vsyncadd [#allocation5], 0
      %s555 = sshll.u32 [#allocation8], 4
      %s556 = int_to_ptr.vmem [resolvable:$true] %s555
      %s557 = sshll.u32 %s2, 4
      %s558 = int_to_ptr.hbm [resolvable:$true] %s557
      %563 = dma.vmem_to_hbm [thread:$0]  %s556, 1024, %s558, [#allocation5], 64, 64, 4
    $region29: #{tpu_custom_call.1} parent=1 // pred_fallthru
      _
    // Predicated region
    $region30: #{tpu_custom_call.1} parent=1 // pred_check
      _
    $region31: #{tpu_custom_call.1} parent=1 // pred_check_branch
      %565 = sbr.rel (0) target = $region33
    $region32: #{tpu_custom_call.1} parent=1 // pred_region
      %567 = vsyncadd [#allocation10], 0
      %s569 = sshll.u32 [#allocation9], 4
      %s570 = int_to_ptr.vmem [resolvable:$true] %s569
      %s571 = sshll.u32 %s3, 4
      %s572 = int_to_ptr.hbm [resolvable:$true] %s571
      %574 = dma.vmem_to_hbm [thread:$0]  %s570, 128, %s572, [#allocation10]
    $region33: #{tpu_custom_call.1} parent=1 // pred_fallthru
      _
    // Predicated region
    $region34: #{tpu_custom_call.1} parent=1 // pred_check
      _
    $region35: #{tpu_custom_call.1} parent=1 // pred_check_branch
      %576 = sbr.rel (0) target = $region37
    $region36: #{tpu_custom_call.1} parent=1 // pred_region
      %578 = dma.done [#allocation5], 1024
    $region37: #{tpu_custom_call.1} parent=1 // pred_fallthru
      _
    // Predicated region
    $region38: #{tpu_custom_call.1} parent=1 // pred_check
      _
    $region39: #{tpu_custom_call.1} parent=1 // pred_check_branch
      %580 = sbr.rel (0) target = $region41
    $region40: #{tpu_custom_call.1} parent=1 // pred_region
      %582 = dma.done [#allocation10], 128
    $region41: #{tpu_custom_call.1} parent=1 // pred_fallthru
      _
    %583 = vsyncpa [#allocation4], 1
    %584 = vsyncpa [#allocation7], 1
    %585 = vsyncpa [#allocation5], 1
    %586 = vsyncpa [#allocation10], 1

</llo_original>
